<compile_context>
chip_gen: v6e
topology: v6e:2x2x1
jax: 0.10.0
libtpu: 0.0.40
codegen_flags: <defaults>
</compile_context>

<pallas_src>
import functools
import math

import jax
import jax.numpy as jnp
from jax.experimental import pallas as pl
from jax.experimental.pallas import tpu as pltpu

_LANES = 128
_ACC_SUBLANES = 8


def _partial_sums_kernel(x_ref, t_ref, oxt_ref, os_ref, acc_xt, acc_s, *,
                         tr, steps_per_core, rows_valid, needs_mask):
    c = pl.program_id(0)    # core-split index ("parallel")
    i = pl.program_id(1)    # streaming step within this split ("arbitrary")

    @pl.when(i == 0)
    def _init():
        acc_xt[...] = jnp.zeros_like(acc_xt)
        acc_s[...] = jnp.zeros_like(acc_s)

    # Stream the native dtype from HBM; do the math / accumulation in f32.
    x = x_ref[...].astype(jnp.float32)       # (tr, 128)
    t = t_ref[...].astype(jnp.float32)       # (tr, 128)

    if needs_mask:
        # Zero rows beyond the valid row count (ragged last tile and/or the
        # clamped duplicate tiles introduced by the core split).  Static
        # Python flag -> no mask code at all in the evenly divisible case.
        row0 = (c * steps_per_core + i) * tr
        rid = jax.lax.broadcasted_iota(jnp.int32, x.shape, 0) + row0
        ok = rid < rows_valid
        x = jnp.where(ok, x, 0.0)
        t = jnp.where(ok, t, 0.0)

    # Whole-vreg accumulation: (tr,128) -> (8,128) with plain vector adds only.
    acc_xt[...] += jnp.sum((x * t).reshape(-1, _ACC_SUBLANES, _LANES), axis=0)
    acc_s[...] += jnp.sum((x + t).reshape(-1, _ACC_SUBLANES, _LANES), axis=0)

    @pl.when(i == pl.num_programs(1) - 1)
    def _emit():
        oxt_ref[...] = acc_xt[...]
        os_ref[...] = acc_s[...]


def logcosh_dice_loss(pred: jax.Array, target: jax.Array, smooth: float = 1.0,
                      *, block_rows: int | None = None,
                      num_core_splits: int = 2) -> jax.Array:
    """LogCosh-Dice loss over the flattened tensors. Returns an f32 scalar."""
    assert pred.shape == target.shape, "input/target shape mismatch"
    x = pred.reshape(-1)
    t = target.reshape(-1)
    n = x.shape[0]
    assert n > 0

    # Pad (with zeros, which do not affect any sum) only to the next multiple
    # of 128 lanes when strictly necessary for the 2-D lane-dense view.  The
    # old full-tile pad (an extra HBM round-trip of both tensors) is gone; the
    # ragged row tail is masked inside the kernel instead.
    rem = n % _LANES
    if rem:
        x = jnp.pad(x, (0, _LANES - rem))
        t = jnp.pad(t, (0, _LANES - rem))
    rows = x.shape[0] // _LANES
    x2 = x.reshape(rows, _LANES)
    t2 = t.reshape(rows, _LANES)

    x_item = x2.dtype.itemsize
    t_item = t2.dtype.itemsize
    # Minimum sublane multiple for the streamed dtypes (f32: 8, bf16: 16, 8-bit: 32).
    row_align = max(_ACC_SUBLANES, 32 // max(1, min(x_item, t_item)))
    if block_rows is None:
        # ~2 MiB per input tile; 2 inputs x 2 pipeline buffers = 8 MiB VMEM,
        # safe under v5e's 16 MiB default scoped limit (v6e/v7x may raise it).
        block_rows = (2 * 1024 * 1024) // (_LANES * max(x_item, t_item))
    tr = min(block_rows, rows)
    tr = max(row_align, pl.cdiv(tr, row_align) * row_align)

    nblk = pl.cdiv(rows, tr)                          # number of real row tiles
    steps_per_core = pl.cdiv(nblk, num_core_splits)   # streaming steps per split
    covered_rows = num_core_splits * steps_per_core * tr
    needs_mask = covered_rows > rows

    if num_core_splits * steps_per_core > nblk:
        # Some (c, i) grid points map past the last real tile; clamp the block
        # index so the DMA stays in bounds (those rows are masked to zero).
        def in_map(c, i):
            return (jnp.minimum(c * steps_per_core + i, nblk - 1), 0)
    else:
        def in_map(c, i):
            return (c * steps_per_core + i, 0)

    kernel = functools.partial(
        _partial_sums_kernel, tr=tr, steps_per_core=steps_per_core,
        rows_valid=rows, needs_mask=needs_mask)

    part_shape = (num_core_splits, _ACC_SUBLANES, _LANES)
    out_block = pl.BlockSpec((None, _ACC_SUBLANES, _LANES), lambda c, i: (c, 0, 0))

    part_xt, part_s = pl.pallas_call(
        kernel,
        out_shape=(jax.ShapeDtypeStruct(part_shape, jnp.float32),
                   jax.ShapeDtypeStruct(part_shape, jnp.float32)),
        grid_spec=pltpu.PrefetchScalarGridSpec(
            num_scalar_prefetch=0,
            grid=(num_core_splits, steps_per_core),
            in_specs=[
                pl.BlockSpec((tr, _LANES), in_map),   # input tile (native dtype)
                pl.BlockSpec((tr, _LANES), in_map),   # target tile (native dtype)
            ],
            out_specs=[out_block, out_block],
            scratch_shapes=[
                pltpu.VMEM((_ACC_SUBLANES, _LANES), jnp.float32),  # sum(x*t)
                pltpu.VMEM((_ACC_SUBLANES, _LANES), jnp.float32),  # sum(x+t)
            ],
        ),
        compiler_params=pltpu.CompilerParams(
            # Core split is embarrassingly parallel; streaming axis carries the
            # resident accumulators -> sequential.
            dimension_semantics=("parallel", "arbitrary")),
        cost_estimate=pl.CostEstimate(
            flops=5 * rows * _LANES,
            transcendentals=0,
            bytes_accessed=rows * _LANES * (x_item + t_item)),
    )(x2, t2)

    # Tiny scalar epilogue in plain JAX (a few KB of partials).
    intersection = jnp.sum(part_xt)
    denom = jnp.sum(part_s)
    smooth = jnp.float32(smooth)
    dice = 1.0 - (2.0 * intersection + smooth) / (denom + smooth)
    # Numerically stable log(cosh(d)) = |d| + log1p(exp(-2|d|)) - log(2).
    ad = jnp.abs(dice)
    return ad + jnp.log1p(jnp.exp(-2.0 * ad)) - jnp.float32(math.log(2.0))


def _reference(pred, target, smooth=1.0):
    xf = pred.astype(jnp.float32).reshape(-1)
    tf = target.astype(jnp.float32).reshape(-1)
    inter = jnp.sum(xf * tf)
    dice = 1.0 - (2.0 * inter + smooth) / (jnp.sum(xf) + jnp.sum(tf) + smooth)
    return jnp.log(jnp.cosh(dice))


if __name__ == "__main__":
    key = jax.random.PRNGKey(0)
    k1, k2, k3, k4 = jax.random.split(key, 4)

    # 1) Small segmentation-like input (f32), single streaming step per core.
    B, C, H, W = 2, 4, 16, 16
    pred = jax.nn.sigmoid(jax.random.normal(k1, (B, C, H, W), dtype=jnp.float32))
    target = (jax.random.uniform(k2, (B, C, H, W)) > 0.5).astype(jnp.float32)

    loss = jax.block_until_ready(logcosh_dice_loss(pred, target, smooth=1.0))
    ref = _reference(pred, target, smooth=1.0)
    assert jnp.allclose(loss, ref, atol=1e-5, rtol=1e-5), (loss, ref)

    # 2) Ragged shape + tiny tile: exercises the 128-pad, multi-step
    #    accumulation and in-kernel row masking paths.
    pred2 = jax.nn.sigmoid(jax.random.normal(k3, (3, 5, 33, 65), dtype=jnp.float32))
    target2 = (jax.random.uniform(k4, (3, 5, 33, 65)) > 0.5).astype(jnp.float32)
    loss2 = jax.block_until_ready(
        logcosh_dice_loss(pred2, target2, smooth=1.0, block_rows=8))
    ref2 = _reference(pred2, target2, smooth=1.0)
    assert jnp.allclose(loss2, ref2, atol=1e-5, rtol=1e-5), (loss2, ref2)

    # 3) Native-dtype streaming path (bf16 tiles, f32 accumulation in-kernel).
    pred_bf = pred.astype(jnp.bfloat16)
    target_bf = target.astype(jnp.bfloat16)
    loss_bf = jax.block_until_ready(logcosh_dice_loss(pred_bf, target_bf, smooth=1.0))
    ref_bf = _reference(pred_bf, target_bf, smooth=1.0)
    assert jnp.allclose(loss_bf, ref_bf, atol=1e-5, rtol=1e-5), (loss_bf, ref_bf)

    print("KERNEL_OK")
</pallas_src>

<mosaic_0001>
module attributes {stable_mosaic.version = 11 : i64} {
  func.func @_partial_sums_kernel(%arg0: i32, %arg1: i32, %arg2: memref<16x128xf32, #tpu.memory_space<vmem>>, %arg3: memref<16x128xf32, #tpu.memory_space<vmem>>, %arg4: memref<1x8x128xf32, #tpu.memory_space<vmem>>, %arg5: memref<1x8x128xf32, #tpu.memory_space<vmem>>, %arg6: memref<8x128xf32, #tpu.memory_space<vmem>>, %arg7: memref<8x128xf32, #tpu.memory_space<vmem>>) attributes {dimension_semantics = [#tpu.dimension_semantics<parallel>, #tpu.dimension_semantics<arbitrary>], iteration_bounds = array<i64: 2, 1>, scalar_prefetch = 0 : i64, scratch_operands = 2 : i64, tpu.core_type = #tpu.core_type<tc>, window_params = [{transform_indices = @transform_0, window_bounds = array<i64: 16, 128>}, {transform_indices = @transform_1, window_bounds = array<i64: 16, 128>}, {transform_indices = @transform_2, window_bounds = array<i64: 1, 8, 128>}, {transform_indices = @transform_3, window_bounds = array<i64: 1, 8, 128>}]} {
    %c0_i32 = arith.constant 0 : i32
    %0 = arith.cmpi eq, %arg1, %c0_i32 : i32
    %1 = arith.extui %0 : i1 to i32
    %c0_i32_0 = arith.constant 0 : i32
    %2 = arith.cmpi ne, %1, %c0_i32_0 : i32
    scf.if %2 {
      %cst_18 = arith.constant 0.000000e+00 : f32
      %32 = vector.broadcast %cst_18 : f32 to vector<8x128xf32>
      %c0_19 = arith.constant 0 : index
      %c0_20 = arith.constant 0 : index
      %33 = vector.load %arg6[%c0_19, %c0_20] : memref<8x128xf32, #tpu.memory_space<vmem>>, vector<8x128xf32>
      tpu.vector_store %arg6[%c0_19, %c0_20], %32 {strides = array<i32>} : memref<8x128xf32, #tpu.memory_space<vmem>>, vector<8x128xf32>,
      %cst_21 = arith.constant 0.000000e+00 : f32
      %34 = vector.broadcast %cst_21 : f32 to vector<8x128xf32>
      %c0_22 = arith.constant 0 : index
      %c0_23 = arith.constant 0 : index
      %35 = vector.load %arg7[%c0_22, %c0_23] : memref<8x128xf32, #tpu.memory_space<vmem>>, vector<8x128xf32>
      tpu.vector_store %arg7[%c0_22, %c0_23], %34 {strides = array<i32>} : memref<8x128xf32, #tpu.memory_space<vmem>>, vector<8x128xf32>,
    } else {
    }
    %c0 = arith.constant 0 : index
    %c0_1 = arith.constant 0 : index
    %3 = vector.load %arg2[%c0, %c0_1] : memref<16x128xf32, #tpu.memory_space<vmem>>, vector<16x128xf32>
    %c0_2 = arith.constant 0 : index
    %c0_3 = arith.constant 0 : index
    %4 = vector.load %arg3[%c0_2, %c0_3] : memref<16x128xf32, #tpu.memory_space<vmem>>, vector<16x128xf32>
    %c1_i32 = arith.constant 1 : i32
    %5 = arith.muli %arg0, %c1_i32 : i32
    %6 = arith.addi %5, %arg1 : i32
    %c16_i32 = arith.constant 16 : i32
    %7 = arith.muli %6, %c16_i32 : i32
    %8 = tpu.iota {dimensions = array<i32: 0>} : vector<16x128xi32>
    %9 = vector.broadcast %7 : i32 to vector<16x128xi32>
    %10 = arith.addi %8, %9 : vector<16x128xi32>
    %c16_i32_4 = arith.constant 16 : i32
    %11 = vector.broadcast %c16_i32_4 : i32 to vector<16x128xi32>
    %12 = arith.cmpi slt, %10, %11 : vector<16x128xi32>
    %cst = arith.constant 0.000000e+00 : f32
    %13 = vector.broadcast %cst : f32 to vector<16x128xf32>
    %14 = arith.select %12, %3, %13 : vector<16x128xi1>, vector<16x128xf32>
    %cst_5 = arith.constant 0.000000e+00 : f32
    %15 = vector.broadcast %cst_5 : f32 to vector<16x128xf32>
    %16 = arith.select %12, %4, %15 : vector<16x128xi1>, vector<16x128xf32>
    %c0_6 = arith.constant 0 : index
    %c0_7 = arith.constant 0 : index
    %17 = vector.load %arg6[%c0_6, %c0_7] : memref<8x128xf32, #tpu.memory_space<vmem>>, vector<8x128xf32>
    %18 = arith.mulf %14, %16 : vector<16x128xf32>
    %19 = vector.shape_cast %18 : vector<16x128xf32> to vector<2x8x128xf32>
    %cst_8 = arith.constant dense<0.000000e+00> : vector<8x128xf32>
    %20 = vector.multi_reduction <add>, %19, %cst_8 [0] : vector<2x8x128xf32> to vector<8x128xf32>
    %21 = arith.addf %17, %20 : vector<8x128xf32>
    %c0_9 = arith.constant 0 : index
    %c0_10 = arith.constant 0 : index
    %22 = vector.load %arg6[%c0_9, %c0_10] : memref<8x128xf32, #tpu.memory_space<vmem>>, vector<8x128xf32>
    tpu.vector_store %arg6[%c0_9, %c0_10], %21 {strides = array<i32>} : memref<8x128xf32, #tpu.memory_space<vmem>>, vector<8x128xf32>,
    %c0_11 = arith.constant 0 : index
    %c0_12 = arith.constant 0 : index
    %23 = vector.load %arg7[%c0_11, %c0_12] : memref<8x128xf32, #tpu.memory_space<vmem>>, vector<8x128xf32>
    %24 = arith.addf %14, %16 : vector<16x128xf32>
    %25 = vector.shape_cast %24 : vector<16x128xf32> to vector<2x8x128xf32>
    %cst_13 = arith.constant dense<0.000000e+00> : vector<8x128xf32>
    %26 = vector.multi_reduction <add>, %25, %cst_13 [0] : vector<2x8x128xf32> to vector<8x128xf32>
    %27 = arith.addf %23, %26 : vector<8x128xf32>
    %c0_14 = arith.constant 0 : index
    %c0_15 = arith.constant 0 : index
    %28 = vector.load %arg7[%c0_14, %c0_15] : memref<8x128xf32, #tpu.memory_space<vmem>>, vector<8x128xf32>
    tpu.vector_store %arg7[%c0_14, %c0_15], %27 {strides = array<i32>} : memref<8x128xf32, #tpu.memory_space<vmem>>, vector<8x128xf32>,
    %c0_i32_16 = arith.constant 0 : i32
    %29 = arith.cmpi eq, %arg1, %c0_i32_16 : i32
    %30 = arith.extui %29 : i1 to i32
    %c0_i32_17 = arith.constant 0 : i32
    %31 = arith.cmpi ne, %30, %c0_i32_17 : i32
    scf.if %31 {
      %c0_18 = arith.constant 0 : index
      %c0_19 = arith.constant 0 : index
      %32 = vector.load %arg6[%c0_18, %c0_19] : memref<8x128xf32, #tpu.memory_space<vmem>>, vector<8x128xf32>
      %c0_20 = arith.constant 0 : index
      %c0_21 = arith.constant 0 : index
      %c0_22 = arith.constant 0 : index
      %33 = vector.load %arg4[%c0_20, %c0_21, %c0_22] : memref<1x8x128xf32, #tpu.memory_space<vmem>>, vector<1x8x128xf32>
      %34 = vector.shape_cast %33 : vector<1x8x128xf32> to vector<8x128xf32>
      %35 = vector.shape_cast %32 : vector<8x128xf32> to vector<1x8x128xf32>
      tpu.vector_store %arg4[%c0_20, %c0_21, %c0_22], %35 {strides = array<i32>} : memref<1x8x128xf32, #tpu.memory_space<vmem>>, vector<1x8x128xf32>,
      %c0_23 = arith.constant 0 : index
      %c0_24 = arith.constant 0 : index
      %36 = vector.load %arg7[%c0_23, %c0_24] : memref<8x128xf32, #tpu.memory_space<vmem>>, vector<8x128xf32>
      %c0_25 = arith.constant 0 : index
      %c0_26 = arith.constant 0 : index
      %c0_27 = arith.constant 0 : index
      %37 = vector.load %arg5[%c0_25, %c0_26, %c0_27] : memref<1x8x128xf32, #tpu.memory_space<vmem>>, vector<1x8x128xf32>
      %38 = vector.shape_cast %37 : vector<1x8x128xf32> to vector<8x128xf32>
      %39 = vector.shape_cast %36 : vector<8x128xf32> to vector<1x8x128xf32>
      tpu.vector_store %arg5[%c0_25, %c0_26, %c0_27], %39 {strides = array<i32>} : memref<1x8x128xf32, #tpu.memory_space<vmem>>, vector<1x8x128xf32>,
    } else {
    }
    return
  }
  func.func @transform_0(%arg0: i32, %arg1: i32) -> (i32, i32) {
    %c1_i32 = arith.constant 1 : i32
    %0 = arith.muli %arg0, %c1_i32 : i32
    %1 = arith.addi %0, %arg1 : i32
    %c0_i32 = arith.constant 0 : i32
    %2 = arith.minsi %1, %c0_i32 : i32
    %c0_i32_0 = arith.constant 0 : i32
    %c0_i32_1 = arith.constant 0 : i32
    return %2, %c0_i32_0 : i32, i32
  }
  func.func @transform_1(%arg0: i32, %arg1: i32) -> (i32, i32) {
    %c1_i32 = arith.constant 1 : i32
    %0 = arith.muli %arg0, %c1_i32 : i32
    %1 = arith.addi %0, %arg1 : i32
    %c0_i32 = arith.constant 0 : i32
    %2 = arith.minsi %1, %c0_i32 : i32
    %c0_i32_0 = arith.constant 0 : i32
    %c0_i32_1 = arith.constant 0 : i32
    return %2, %c0_i32_0 : i32, i32
  }
  func.func @transform_2(%arg0: i32, %arg1: i32) -> (i32, i32, i32) {
    %c0_i32 = arith.constant 0 : i32
    %c0_i32_0 = arith.constant 0 : i32
    %c0_i32_1 = arith.constant 0 : i32
    return %arg0, %c0_i32, %c0_i32_0 : i32, i32, i32
  }
  func.func @transform_3(%arg0: i32, %arg1: i32) -> (i32, i32, i32) {
    %c0_i32 = arith.constant 0 : i32
    %c0_i32_0 = arith.constant 0 : i32
    %c0_i32_1 = arith.constant 0 : i32
    return %arg0, %c0_i32, %c0_i32_0 : i32, i32, i32
  }
}

</mosaic_0001>

<llo_original>
// kernel: tpu_custom_call.1
$region0: #{tpu_custom_call.1}
  #allocation0 [shape = 'u32[]', space=smem, size = 0x4, offset = 0x4, fixed_abs, tag = 'smem constant byte address 0x4 - core index']
  #allocation1 [shape = 'u32[144,128]{1,0:T(1,128)}', space=vmem, size = 0x12000, scoped, tag = 'internal scratch']
  #allocation2 [shape = 'f32[8,128]{1,0:T(8,128)}', space=vmem, size = 0x1000, scoped, tag = 'scratch operand']
  #allocation3 [shape = 'f32[8,128]{1,0:T(8,128)}', space=vmem, size = 0x1000, scoped, tag = 'scratch operand']
  %s0 = inlined_call_operand.hbm [shape: f32[16,128], index: 0, kind: input, shape index: {}]
  %s1 = inlined_call_operand.hbm [shape: f32[16,128], index: 1, kind: input, shape index: {}]
  %s2 = inlined_call_operand.hbm [shape: f32[2,8,128], index: 2, kind: output, shape index: {0}]
  %s3 = inlined_call_operand.hbm [shape: f32[2,8,128], index: 3, kind: output, shape index: {1}]
  %4 = xla_tuple %s2, %s3
  %s5 = sld [smem:[#allocation0]]
  $region65: #{tpu_custom_call.1} parent=0
    _
  %s7 = ssub.s32 1, %s5
  %s8 = scalar_select 0, %s7, %s5
  $region1: #{tpu_custom_call.1} parent=0
    #allocation4 [shape = 'u8[16384]{0}', space=vmem, size = 0x4000, scoped, tag = 'input window, operand 0']
    #allocation5 [shape = 's32[2]{0}', space=sflag, size = 0x8, scoped, tag = 'scoped memory for tpu_custom_call.1']
    #allocation6 [shape = 's32[2]{0}', space=sflag, size = 0x8, scoped, tag = 'scoped memory for tpu_custom_call.1']
    #allocation7 [shape = 'u8[16384]{0}', space=vmem, size = 0x4000, scoped, tag = 'input window, operand 1']
    #allocation8 [shape = 's32[2]{0}', space=sflag, size = 0x8, scoped, tag = 'scoped memory for tpu_custom_call.1']
    #allocation9 [shape = 'u8[8192]{0}', space=vmem, size = 0x2000, scoped, tag = 'output window, operand 0']
    #allocation10 [shape = 'u8[8192]{0}', space=vmem, size = 0x2000, scoped, tag = 'output window, operand 1']
    #allocation11 [shape = 's32[2]{0}', space=sflag, size = 0x8, scoped, tag = 'scoped memory for tpu_custom_call.1']
    %9 = vsyncpa [#allocation5], 0
    %s10 = scalar_lea.sflag [#allocation5], 1
    %11 = vsyncpa %s10, 0
    %12 = vsyncpa [#allocation8], 0
    %s13 = scalar_lea.sflag [#allocation8], 1
    %14 = vsyncpa %s13, 0
    %15 = vsyncpa [#allocation6], 0
    %s16 = scalar_lea.sflag [#allocation6], 1
    %17 = vsyncpa %s16, 0
    %18 = vsyncpa [#allocation11], 0
    %s19 = scalar_lea.sflag [#allocation11], 1
    %20 = vsyncpa %s19, 0
    loop: start=0, step=1, limit=4
    $region2: #{tpu_custom_call.1} parent=1 // loop_pre_header
      _
    $region3: #{tpu_custom_call.1} parent=1 // loop_header
      %s22 = sphi 0, %s26
      %p23 = scmp.ge.s32.totalorder %s22, 4
      %s29 = sphi 0, %s41
      %s30 = sphi 0, %s37
      %s31 = sphi 0, %s29
      %s32 = sphi 0, %s30
      %s33 = sphi 0, %s31
      %s34 = sphi 0, %s32
      %s50 = sphi 0, %s52
      %s53 = sphi 0, %s50
      %s54 = sphi 0, %s53
      %s70 = sphi 0, %s54
      %s82 = sphi 0, %s84
      %s85 = sphi 0, %s82
      %s86 = sphi 0, %s85
      %s102 = sphi 0, %s86
      %s108 = sphi 0, %s110
      %s111 = sphi 0, %s108
      %s112 = sphi 0, %s111
      %s128 = sphi 0, %s112
      %s134 = sphi 0, %s136
      %s137 = sphi 0, %s134
      %s138 = sphi 0, %s137
      %s154 = sphi 0, %s138
    $region4: #{tpu_custom_call.1} parent=1 // loop_header_branch
      %25 = sbr.rel (%p23) target = $region8
    $region5: #{tpu_custom_call.1} parent=1 // loop_body
      %s27 = ssub.s32 %s22, 1
      %s28 = ssub.s32 %s22, 2
      %s35 = sadd.s32 1, %s30
      %p36 = scmp.ge.s32.totalorder %s35, 1
      %s37 = scalar_select %p36, 0, %s35
      %s38 = sadd.s32 1, %s29
      %s39 = scalar_select %p36, %s38, %s29
      %p40 = scmp.ge.s32.totalorder %s39, 2
      %s41 = scalar_select %p40, 0, %s39
      %s42 = sadd.s32 %s29, %s30
      %p43 = scmp.lt.s32.totalorder %s42, 0
      %s44 = scalar_select %p43, %s42, 0
      %s45 = sadd.s32 %s41, %s37
      %p46 = scmp.lt.s32.totalorder %s45, 0
      %s47 = scalar_select %p46, %s45, 0
      %s48 = ssub.s32 %s44, %s47
      %p49 = scmp.eq.s32.totalorder %s48, 0
      %s51 = sadd.s32 %s50, 1
      %s52 = scalar_select %p49, %s50, %s51
      %p55 = pneg %p49
      %p56 = scmp.eq.s32.totalorder %s22, 1
      %p57 = por %p55, %p56
      %p58 = scmp.ne.s32.totalorder %s50, %s53
      %p59 = scmp.eq.s32.totalorder %s22, 0
      %p60 = por %p58, %p59
      %p61 = scmp.ne.s32.totalorder %s50, %s53
      %p62 = scmp.eq.s32.totalorder %s27, 1
      %p63 = por %p61, %p62
      %p64 = scmp.ne.s32.totalorder %s53, %s54
      %p65 = scmp.eq.s32.totalorder %s27, 0
      %p66 = por %p64, %p65
      %p67 = scmp.ne.s32.totalorder %s53, %s54
      %p68 = scmp.eq.s32.totalorder %s28, 1
      %p69 = por %p67, %p68
      %p71 = scmp.ne.s32.totalorder %s54, %s70
      %p72 = scmp.eq.s32.totalorder %s28, 0
      %p73 = por %p71, %p72
      %s74 = sadd.s32 %s29, %s30
      %p75 = scmp.lt.s32.totalorder %s74, 0
      %s76 = scalar_select %p75, %s74, 0
      %s77 = sadd.s32 %s41, %s37
      %p78 = scmp.lt.s32.totalorder %s77, 0
      %s79 = scalar_select %p78, %s77, 0
      %s80 = ssub.s32 %s76, %s79
      %p81 = scmp.eq.s32.totalorder %s80, 0
      %s83 = sadd.s32 %s82, 1
      %s84 = scalar_select %p81, %s82, %s83
      %p87 = pneg %p81
      %p88 = scmp.eq.s32.totalorder %s22, 1
      %p89 = por %p87, %p88
      %p90 = scmp.ne.s32.totalorder %s82, %s85
      %p91 = scmp.eq.s32.totalorder %s22, 0
      %p92 = por %p90, %p91
      %p93 = scmp.ne.s32.totalorder %s82, %s85
      %p94 = scmp.eq.s32.totalorder %s27, 1
      %p95 = por %p93, %p94
      %p96 = scmp.ne.s32.totalorder %s85, %s86
      %p97 = scmp.eq.s32.totalorder %s27, 0
      %p98 = por %p96, %p97
      %p99 = scmp.ne.s32.totalorder %s85, %s86
      %p100 = scmp.eq.s32.totalorder %s28, 1
      %p101 = por %p99, %p100
      %p103 = scmp.ne.s32.totalorder %s86, %s102
      %p104 = scmp.eq.s32.totalorder %s28, 0
      %p105 = por %p103, %p104
      %s106 = ssub.s32 %s29, %s41
      %p107 = scmp.eq.s32.totalorder %s106, 0
      %s109 = sadd.s32 %s108, 1
      %s110 = scalar_select %p107, %s108, %s109
      %p113 = pneg %p107
      %p114 = scmp.eq.s32.totalorder %s22, 1
      %p115 = por %p113, %p114
      %p116 = scmp.ne.s32.totalorder %s108, %s111
      %p117 = scmp.eq.s32.totalorder %s22, 0
      %p118 = por %p116, %p117
      %p119 = scmp.ne.s32.totalorder %s108, %s111
      %p120 = scmp.eq.s32.totalorder %s27, 1
      %p121 = por %p119, %p120
      %p122 = scmp.ne.s32.totalorder %s111, %s112
      %p123 = scmp.eq.s32.totalorder %s27, 0
      %p124 = por %p122, %p123
      %p125 = scmp.ne.s32.totalorder %s111, %s112
      %p126 = scmp.eq.s32.totalorder %s28, 1
      %p127 = por %p125, %p126
      %p129 = scmp.ne.s32.totalorder %s112, %s128
      %p130 = scmp.eq.s32.totalorder %s28, 0
      %p131 = por %p129, %p130
      %s132 = ssub.s32 %s29, %s41
      %p133 = scmp.eq.s32.totalorder %s132, 0
      %s135 = sadd.s32 %s134, 1
      %s136 = scalar_select %p133, %s134, %s135
      %p139 = pneg %p133
      %p140 = scmp.eq.s32.totalorder %s22, 1
      %p141 = por %p139, %p140
      %p142 = scmp.ne.s32.totalorder %s134, %s137
      %p143 = scmp.eq.s32.totalorder %s22, 0
      %p144 = por %p142, %p143
      %p145 = scmp.ne.s32.totalorder %s134, %s137
      %p146 = scmp.eq.s32.totalorder %s27, 1
      %p147 = por %p145, %p146
      %p148 = scmp.ne.s32.totalorder %s137, %s138
      %p149 = scmp.eq.s32.totalorder %s27, 0
      %p150 = por %p148, %p149
      %p151 = scmp.ne.s32.totalorder %s137, %s138
      %p152 = scmp.eq.s32.totalorder %s28, 1
      %p153 = por %p151, %p152
      %p155 = scmp.ne.s32.totalorder %s138, %s154
      %p156 = scmp.eq.s32.totalorder %s28, 0
      %p157 = por %p155, %p156
      %p158 = scmp.le.s32.totalorder 1, %s22
      %p159 = scmp.lt.s32.totalorder %s22, 3
      %p160 = pnand %p158, %p159
      %p161 = pneg %p160
      // Predicated region
      $region9: #{tpu_custom_call.1} parent=5 // pred_check
        _
      $region10: #{tpu_custom_call.1} parent=5 // pred_check_branch
        %163 = sbr.rel (%p160) target = $region12
      $region11: #{tpu_custom_call.1} parent=5 // pred_region
        %s164 = ssub.s32 %s22, 1
      $region12: #{tpu_custom_call.1} parent=5 // pred_fallthru
        _
      %p165 = scmp.lt.s32.totalorder %s22, 2
      // Predicated region
      $region13: #{tpu_custom_call.1} parent=5 // pred_check
        %p166 = pneg %p165
      $region14: #{tpu_custom_call.1} parent=5 // pred_check_branch
        %168 = sbr.rel (%p166) target = $region16
      $region15: #{tpu_custom_call.1} parent=5 // pred_region
        // Predicated region
        $region17: #{tpu_custom_call.1} parent=15 // pred_check
          %p169 = pneg %p60
        $region18: #{tpu_custom_call.1} parent=15 // pred_check_branch
          %171 = sbr.rel (%p169) target = $region20
        $region19: #{tpu_custom_call.1} parent=15 // pred_region
          %s172 = sand.u32 %s50, 1
          %s173 = scalar_lea.sflag [#allocation5], %s172
          %s174 = sand.u32 %s50, 1
          %s175 = smul.addr %s174, 16
          %s176 = scalar_lea.vmem [#allocation4], %s175
          %s177 = sadd.s32 %s29, %s30
          %p178 = scmp.lt.s32.totalorder %s177, 0
          %s179 = scalar_select %p178, %s177, 0
          %s180 = smul.u32 2, %s179
          %s182 = ssub.s32 256, 256
          %183 = vsyncadd %s173, %s182
          %s184 = smul.addr %s180, 128
          %s185 = scalar_lea.hbm %s0, %s184
          %s186 = sshll.u32 %s176, 4
          %s187 = int_to_ptr.vmem [resolvable:$true] %s186
          %192 = dma.hbm_to_vmem [thread:$0]  %s185, 256, %s187, %s173, 128, 128, 8
        $region20: #{tpu_custom_call.1} parent=15 // pred_fallthru
          _
        // Predicated region
        $region21: #{tpu_custom_call.1} parent=15 // pred_check
          %p193 = pneg %p92
        $region22: #{tpu_custom_call.1} parent=15 // pred_check_branch
          %195 = sbr.rel (%p193) target = $region24
        $region23: #{tpu_custom_call.1} parent=15 // pred_region
          %s196 = sand.u32 %s82, 1
          %s197 = scalar_lea.sflag [#allocation8], %s196
          %s198 = sand.u32 %s82, 1
          %s199 = smul.addr %s198, 16
          %s200 = scalar_lea.vmem [#allocation7], %s199
          %s201 = sadd.s32 %s29, %s30
          %p202 = scmp.lt.s32.totalorder %s201, 0
          %s203 = scalar_select %p202, %s201, 0
          %s204 = smul.u32 2, %s203
          %s206 = ssub.s32 256, 256
          %207 = vsyncadd %s197, %s206
          %s208 = smul.addr %s204, 128
          %s209 = scalar_lea.hbm %s1, %s208
          %s210 = sshll.u32 %s200, 4
          %s211 = int_to_ptr.vmem [resolvable:$true] %s210
          %216 = dma.hbm_to_vmem [thread:$0]  %s209, 256, %s211, %s197, 128, 128, 8
        $region24: #{tpu_custom_call.1} parent=15 // pred_fallthru
          _
      $region16: #{tpu_custom_call.1} parent=5 // pred_fallthru
        _
      %p217 = scmp.le.s32.totalorder 1, %s22
      %p218 = scmp.lt.s32.totalorder %s22, 3
      %p219 = pnand %p217, %p218
      %p220 = pneg %p219
      // Predicated region
      $region25: #{tpu_custom_call.1} parent=5 // pred_check
        _
      $region26: #{tpu_custom_call.1} parent=5 // pred_check_branch
        %222 = sbr.rel (%p219) target = $region28
      $region27: #{tpu_custom_call.1} parent=5 // pred_region
        %s223 = ssub.s32 %s22, 1
        %s224 = sand.u32 %s53, 1
        %s225 = scalar_lea.sflag [#allocation5], %s224
        %s226 = sand.u32 %s53, 1
        %s227 = smul.addr %s226, 16
        %s228 = scalar_lea.vmem [#allocation4], %s227
        // Predicated region
        $region29: #{tpu_custom_call.1} parent=27 // pred_check
          %p229 = pneg %p66
        $region30: #{tpu_custom_call.1} parent=27 // pred_check_branch
          %231 = sbr.rel (%p229) target = $region32
        $region31: #{tpu_custom_call.1} parent=27 // pred_region
          %232 = dma.done %s225, 256
        $region32: #{tpu_custom_call.1} parent=27 // pred_fallthru
          _
        %s233 = sand.u32 %s85, 1
        %s234 = scalar_lea.sflag [#allocation8], %s233
        %s235 = sand.u32 %s85, 1
        %s236 = smul.addr %s235, 16
        %s237 = scalar_lea.vmem [#allocation7], %s236
        // Predicated region
        $region33: #{tpu_custom_call.1} parent=27 // pred_check
          %p238 = pneg %p98
        $region34: #{tpu_custom_call.1} parent=27 // pred_check_branch
          %240 = sbr.rel (%p238) target = $region36
        $region35: #{tpu_custom_call.1} parent=27 // pred_region
          %241 = dma.done %s234, 256
        $region36: #{tpu_custom_call.1} parent=27 // pred_fallthru
          _
        %s242 = sand.u32 %s53, 1
        %s243 = scalar_lea.sflag [#allocation5], %s242
        %s244 = sand.u32 %s53, 1
        %s245 = smul.addr %s244, 16
        %s246 = scalar_lea.vmem [#allocation4], %s245
        %p247 = pneg %p66
        %p248 = pneg %p63
        %s249 = sand.u32 %s85, 1
        %s250 = scalar_lea.sflag [#allocation8], %s249
        %s251 = sand.u32 %s85, 1
        %s252 = smul.addr %s251, 16
        %s253 = scalar_lea.vmem [#allocation7], %s252
        %p254 = pneg %p98
        %p255 = pneg %p95
        %p256 = pneg %p124
        %p257 = pneg %p121
        %s258 = sand.u32 %s111, 1
        %s259 = scalar_lea.sflag [#allocation6], %s258
        %s260 = sand.u32 %s111, 1
        %s261 = smul.addr %s260, 8
        %s262 = scalar_lea.vmem [#allocation9], %s261
        %p263 = pneg %p150
        %p264 = pneg %p147
        %s265 = sand.u32 %s137, 1
        %s266 = scalar_lea.sflag [#allocation11], %s265
        %s267 = sand.u32 %s137, 1
        %s268 = smul.addr %s267, 8
        %s269 = scalar_lea.vmem [#allocation10], %s268
        %s270 = sadd.s32 %s31, %s32
        %p271 = scmp.lt.s32.totalorder %s270, 0
        %s272 = scalar_select %p271, %s270, 0
        %s273 = smul.u32 2, %s272
        %s274 = sadd.s32 %s31, %s32
        %p275 = scmp.lt.s32.totalorder %s274, 0
        %s276 = scalar_select %p275, %s274, 0
        %s277 = smul.u32 2, %s276
        %p278 = scmp.eq.s32.totalorder %s32, 0
        // Predicated region
        $region37: #{tpu_custom_call.1} parent=27 // pred_check
          %p279 = pneg %p278
        $region38: #{tpu_custom_call.1} parent=27 // pred_check_branch
          %281 = sbr.rel (%p279) target = $region40
        $region39: #{tpu_custom_call.1} parent=27 // pred_region
          %282 = vst [vmem:[#allocation2] sm:$0xff] 0.0
          %283 = vst [vmem:[#allocation3] sm:$0xff] 0.0
        $region40: #{tpu_custom_call.1} parent=27 // pred_fallthru
          _
        %v284 = vld [vmem:[%s228] sm:$0xff]
        %v285 = vld [vmem:[%s228 + $0x8] sm:$0xff]
        %v286 = vld [vmem:[%s237] sm:$0xff]
        %v287 = vld [vmem:[%s237 + $0x8] sm:$0xff]
        %s288 = sadd.s32 %s31, %s32
        %s289 = smul.u32 %s288, 16
        %v290 = vlaneseq
        %v291 = vshrl.u32 %v290, 7
        %v292 = vadd.s32 %v291, 8
        %v293 = vstv %s289
        %v294 = vadd.s32 %v291, %v293
        %v295 = vadd.s32 %v292, %v293
        %vm296 = vcmp.lt.s32.totalorder %v294, 16
        %vm297 = vcmp.lt.s32.totalorder %v295, 16
        %v298 = vsel %vm296, %v284, 0.0
        %v299 = vsel %vm297, %v285, 0.0
        %v300 = vsel %vm296, %v286, 0.0
        %v301 = vsel %vm297, %v287, 0.0
        %v302 = vld [vmem:[#allocation2] sm:$0xff]
        %v303 = vmul.f32 %v298, %v300
        %v304 = vmul.f32 %v299, %v301
        %v305 = vadd.f32 %v303, %v304
        %v306 = vadd.f32 %v302, %v305
        %307 = vst [vmem:[#allocation2] sm:$0xff] %v306
        %v308 = vld [vmem:[#allocation3] sm:$0xff]
        %v309 = vadd.f32 %v298, %v300
        %v310 = vadd.f32 %v299, %v301
        %v311 = vadd.f32 %v309, %v310
        %v312 = vadd.f32 %v308, %v311
        %313 = vst [vmem:[#allocation3] sm:$0xff] %v312
        // Predicated region
        $region41: #{tpu_custom_call.1} parent=27 // pred_check
          %p314 = pneg %p278
        $region42: #{tpu_custom_call.1} parent=27 // pred_check_branch
          %316 = sbr.rel (%p314) target = $region44
        $region43: #{tpu_custom_call.1} parent=27 // pred_region
          %v317 = vld [vmem:[#allocation2] sm:$0xff]
          %318 = vst [vmem:[%s262] sm:$0xff] %v317
          %v319 = vld [vmem:[#allocation3] sm:$0xff]
          %320 = vst [vmem:[%s269] sm:$0xff] %v319
        $region44: #{tpu_custom_call.1} parent=27 // pred_fallthru
          _
        %s321 = sand.u32 %s111, 1
        %s322 = scalar_lea.sflag [#allocation6], %s321
        %s323 = sand.u32 %s111, 1
        %s324 = smul.addr %s323, 8
        %s325 = scalar_lea.vmem [#allocation9], %s324
        %s326 = sand.u32 %s137, 1
        %s327 = scalar_lea.sflag [#allocation11], %s326
        %s328 = sand.u32 %s137, 1
        %s329 = smul.addr %s328, 8
        %s330 = scalar_lea.vmem [#allocation10], %s329
        // Predicated region
        $region45: #{tpu_custom_call.1} parent=27 // pred_check
          %p331 = pneg %p121
        $region46: #{tpu_custom_call.1} parent=27 // pred_check_branch
          %333 = sbr.rel (%p331) target = $region48
        $region47: #{tpu_custom_call.1} parent=27 // pred_region
          %s335 = ssub.s32 128, 128
          %336 = vsyncadd %s322, %s335
          %s337 = smul.addr %s31, 128
          %s338 = scalar_lea.hbm %s2, %s337
          %s340 = sshll.u32 %s325, 4
          %s341 = int_to_ptr.vmem [resolvable:$true] %s340
          %343 = dma.vmem_to_hbm [thread:$0]  %s341, 128, %s338, %s322
        $region48: #{tpu_custom_call.1} parent=27 // pred_fallthru
          _
        // Predicated region
        $region49: #{tpu_custom_call.1} parent=27 // pred_check
          %p344 = pneg %p147
        $region50: #{tpu_custom_call.1} parent=27 // pred_check_branch
          %346 = sbr.rel (%p344) target = $region52
        $region51: #{tpu_custom_call.1} parent=27 // pred_region
          %s348 = ssub.s32 128, 128
          %349 = vsyncadd %s327, %s348
          %s350 = smul.addr %s31, 128
          %s351 = scalar_lea.hbm %s3, %s350
          %s353 = sshll.u32 %s330, 4
          %s354 = int_to_ptr.vmem [resolvable:$true] %s353
          %356 = dma.vmem_to_hbm [thread:$0]  %s354, 128, %s351, %s327
        $region52: #{tpu_custom_call.1} parent=27 // pred_fallthru
          _
      $region28: #{tpu_custom_call.1} parent=5 // pred_fallthru
        _
      %p357 = scmp.le.s32.totalorder 2, %s22
      // Predicated region
      $region53: #{tpu_custom_call.1} parent=5 // pred_check
        %p358 = pneg %p357
      $region54: #{tpu_custom_call.1} parent=5 // pred_check_branch
        %360 = sbr.rel (%p358) target = $region56
      $region55: #{tpu_custom_call.1} parent=5 // pred_region
        %s361 = ssub.s32 %s22, 2
        // Predicated region
        $region57: #{tpu_custom_call.1} parent=55 // pred_check
          %p362 = pneg %p127
        $region58: #{tpu_custom_call.1} parent=55 // pred_check_branch
          %364 = sbr.rel (%p362) target = $region60
        $region59: #{tpu_custom_call.1} parent=55 // pred_region
          %s365 = sand.u32 %s112, 1
          %s366 = scalar_lea.sflag [#allocation6], %s365
          %s367 = sand.u32 %s112, 1
          %s368 = smul.addr %s367, 8
          %s369 = scalar_lea.vmem [#allocation9], %s368
          %370 = dma.done %s366, 128
        $region60: #{tpu_custom_call.1} parent=55 // pred_fallthru
          _
        // Predicated region
        $region61: #{tpu_custom_call.1} parent=55 // pred_check
          %p371 = pneg %p153
        $region62: #{tpu_custom_call.1} parent=55 // pred_check_branch
          %373 = sbr.rel (%p371) target = $region64
        $region63: #{tpu_custom_call.1} parent=55 // pred_region
          %s374 = sand.u32 %s138, 1
          %s375 = scalar_lea.sflag [#allocation11], %s374
          %s376 = sand.u32 %s138, 1
          %s377 = smul.addr %s376, 8
          %s378 = scalar_lea.vmem [#allocation10], %s377
          %379 = dma.done %s375, 128
        $region64: #{tpu_custom_call.1} parent=55 // pred_fallthru
          _
      $region56: #{tpu_custom_call.1} parent=5 // pred_fallthru
        _
    $region6: #{tpu_custom_call.1} parent=1 // loop_footer
      %s26 = sadd.s32 1, %s22
    $region7: #{tpu_custom_call.1} parent=1 // loop_footer_branch
      %21 = sbr.rel target = $region3
    $region8: #{tpu_custom_call.1} parent=1 // loop_exit
      _
    %380 = vsyncpa [#allocation5], 1
    %s381 = scalar_lea.sflag [#allocation5], 1
    %382 = vsyncpa %s381, 1
    %383 = vsyncpa [#allocation8], 1
    %s384 = scalar_lea.sflag [#allocation8], 1
    %385 = vsyncpa %s384, 1
    %386 = vsyncpa [#allocation6], 1
    %s387 = scalar_lea.sflag [#allocation6], 1
    %388 = vsyncpa %s387, 1
    %389 = vsyncpa [#allocation11], 1
    %s390 = scalar_lea.sflag [#allocation11], 1
    %391 = vsyncpa %s390, 1

</llo_original>
